<compile_context>
chip_gen: v7x
topology: tpu7x:2x2x1
jax: 0.10.0
libtpu: 0.0.40
codegen_flags: <defaults>
</compile_context>

<pallas_src>
import functools

import jax
import jax.numpy as jnp
from jax import lax
from jax.experimental import pallas as pl
from jax.experimental.pallas import tpu as pltpu


def _round_up(x, m):
    return ((x + m - 1) // m) * m


# ---------------------------------------------------------------------------
# Kernel bodies
# ---------------------------------------------------------------------------
def _block_logits(c_ref, r0, block_a, n_valid, a_valid):
    """Per-block shared compute: logits (already / temperature), masks, log-denominator."""
    c = c_ref[...]                                    # [n_pad, d_pad], resident in VMEM
    a = c_ref[pl.ds(r0, block_a), :]                  # anchors are rows of contrast

    # Contract both operands over their last (lane) dim -> A @ C^T without a transpose.
    logits = lax.dot_general(
        a, c, dimension_numbers=(((1,), (1,)), ((), ())),
        preferred_element_type=jnp.float32)           # [block_a, n_pad] f32 (MXU)
    n_pad = logits.shape[1]

    col = lax.broadcasted_iota(jnp.int32, (block_a, n_pad), 1)
    row = r0 + lax.broadcasted_iota(jnp.int32, (block_a, n_pad), 0)
    col_valid = col < n_valid                         # drop zero-padded contrast columns
    lmask = jnp.logical_and(col_valid, col != row)    # also drop self-contrast (diagonal)

    # Row max over the real columns only (matches the reference; shift cancels anyway).
    lmax = jnp.max(jnp.where(col_valid, logits, jnp.float32(-1e30)),
                   axis=1, keepdims=True)
    logits = logits - lmax

    exp_l = jnp.where(lmask, jnp.exp(logits), jnp.float32(0.0))
    log_denom = jnp.log(jnp.sum(exp_l, axis=1, keepdims=True))     # [block_a, 1]

    row_valid = (r0 + lax.broadcasted_iota(jnp.int32, (block_a, 1), 0)) < a_valid
    return logits, lmask, log_denom, row_valid


def _finish_block(out_ref, logits, log_denom, row_valid, pos_w):
    # sum(mask * log_prob) = sum(mask * logits) - log_denom * sum(mask)
    # (log_prob is never materialized as a full [block_a, n_pad] array).
    sum_pos = jnp.sum(pos_w, axis=1, keepdims=True)
    sum_pos_logits = jnp.sum(pos_w * logits, axis=1, keepdims=True)
    num = sum_pos_logits - log_denom * sum_pos

    # Rows with zero positives keep the reference's 0/0 -> NaN behavior; padded rows
    # (row_valid == False) contribute exactly 0.
    safe_den = jnp.where(row_valid, sum_pos, jnp.float32(1.0))
    contrib = jnp.where(row_valid, num / safe_den, jnp.float32(0.0))

    # One lane/sublane-dense scalar tile per grid block; wrapper sums and negates.
    out_ref[...] = jnp.full(out_ref.shape, jnp.sum(contrib), dtype=jnp.float32)


def _supcon_labels_kernel(c_ref, lab_col_ref, lab_row_ref, out_ref, *,
                          block_a, n_valid, a_valid):
    i = pl.program_id(0)
    r0 = pl.multiple_of(i * block_a, block_a)
    logits, lmask, log_denom, row_valid = _block_logits(
        c_ref, r0, block_a, n_valid, a_valid)

    lab_a = lab_col_ref[pl.ds(r0, block_a), :]        # [block_a, 1] int32 (anchor labels)
    lab_c = lab_row_ref[...]                          # [1, n_pad]  int32 (contrast labels)
    pos = jnp.logical_and(lab_a == lab_c, lmask)      # rebuilt tiled mask, no [A,N] DMA
    _finish_block(out_ref, logits, log_denom, row_valid, pos.astype(jnp.float32))


def _supcon_mask_kernel(c_ref, mask_ref, out_ref, *, block_a, n_valid, a_valid):
    i = pl.program_id(0)
    r0 = pl.multiple_of(i * block_a, block_a)
    logits, lmask, log_denom, row_valid = _block_logits(
        c_ref, r0, block_a, n_valid, a_valid)
    pos_w = mask_ref[...] * lmask.astype(jnp.float32)
    _finish_block(out_ref, logits, log_denom, row_valid, pos_w)


# ---------------------------------------------------------------------------
# Wrapper
# ---------------------------------------------------------------------------
def supcon_loss(features, intents=None, mask=None, *, temperature=0.07,
                contrast_mode="all", block_a=128, use_bf16=True):
    """Pallas implementation of SupConLoss.forward (returns a scalar loss)."""
    if features.ndim < 3:
        raise ValueError("`features` needs to be [bsz, n_views, ...], >=3 dims required")
    if features.ndim > 3:
        features = features.reshape(features.shape[0], features.shape[1], -1)
    if intents is not None and mask is not None:
        raise ValueError("Cannot define both `labels` and `mask`")

    bsz, n_views, d = features.shape
    n = n_views * bsz

    if contrast_mode == "one":
        a_rows, anchor_count = bsz, 1
    elif contrast_mode == "all":
        a_rows, anchor_count = n, n_views
    else:
        raise ValueError(f"Unknown mode: {contrast_mode}")

    # contrast_feature = cat(unbind(features, 1), 0): row r = (view r//bsz, sample r%bsz).
    contrast = jnp.transpose(features, (1, 0, 2)).reshape(n, d).astype(jnp.float32)

    # Row-L2-normalize (F.normalize eps) with rsqrt; fold sqrt(1/T) into the same scale
    # so dot products come out of the MXU already divided by the temperature.
    sq = jnp.sum(contrast * contrast, axis=1, keepdims=True)
    scale = lax.rsqrt(jnp.maximum(sq, jnp.float32(1e-24))) * jnp.float32(
        (1.0 / float(temperature)) ** 0.5)
    contrast_n = contrast * scale

    d_pad = _round_up(d, 128)
    n_pad = _round_up(n, 128)
    if n_pad % block_a != 0:
        block_a = 128                      # 128 always divides n_pad
    block_a = min(block_a, n_pad)
    num_blocks = (a_rows + block_a - 1) // block_a

    feat_dtype = jnp.bfloat16 if use_bf16 else jnp.float32
    contrast_p = jnp.zeros((n_pad, d_pad), jnp.float32)
    contrast_p = contrast_p.at[:n, :d].set(contrast_n).astype(feat_dtype)

    out_shape = jax.ShapeDtypeStruct((num_blocks, 8, 128), jnp.float32)
    out_spec = pl.BlockSpec((1, 8, 128), lambda i: (i, 0, 0))
    c_spec = pl.BlockSpec((n_pad, d_pad), lambda i: (0, 0))     # resident, not re-DMA'd
    cparams = pltpu.CompilerParams(
        dimension_semantics=("parallel",),        # shards row blocks across TCs (v7x)
        vmem_limit_bytes=32 * 1024 * 1024)

    if mask is None:
        if intents is None:
            labels = jnp.arange(bsz, dtype=jnp.int32)           # eye mask == identity labels
        else:
            labels = jnp.asarray(intents).reshape(-1).astype(jnp.int32)
            if labels.shape[0] != bsz:
                raise ValueError("Num of labels does not match num of features")
        clabels = jnp.tile(labels, n_views)                     # label of each contrast row
        lab_col = jnp.zeros((n_pad, 1), jnp.int32).at[:n, 0].set(clabels)
        lab_row = jnp.zeros((1, n_pad), jnp.int32).at[0, :n].set(clabels)

        kernel = functools.partial(_supcon_labels_kernel, block_a=block_a,
                                   n_valid=n, a_valid=a_rows)
        partials = pl.pallas_call(
            kernel,
            out_shape=out_shape,
            grid=(num_blocks,),
            in_specs=[c_spec,
                      pl.BlockSpec((n_pad, 1), lambda i: (0, 0)),
                      pl.BlockSpec((1, n_pad), lambda i: (0, 0))],
            out_specs=out_spec,
            compiler_params=cparams,
        )(contrast_p, lab_col, lab_row)
    else:
        # Rare explicit-mask path (mask may be asymmetric / weighted): ship a per-block
        # f32 mask tile instead of labels.
        base_mask = jnp.asarray(mask).astype(jnp.float32)
        tiled = jnp.tile(base_mask, (anchor_count, n_views))    # [A, N]
        a_pad = num_blocks * block_a
        tiled_p = jnp.zeros((a_pad, n_pad), jnp.float32).at[:a_rows, :n].set(tiled)

        kernel = functools.partial(_supcon_mask_kernel, block_a=block_a,
                                   n_valid=n, a_valid=a_rows)
        partials = pl.pallas_call(
            kernel,
            out_shape=out_shape,
            grid=(num_blocks,),
            in_specs=[c_spec,
                      pl.BlockSpec((block_a, n_pad), lambda i: (i, 0))],
            out_specs=out_spec,
            compiler_params=cparams,
        )(contrast_p, tiled_p)

    return -(jnp.sum(partials[:, 0, 0]) / jnp.float32(a_rows))


# ---------------------------------------------------------------------------
# Pure-JAX reference (mirrors the PyTorch forward) for verification
# ---------------------------------------------------------------------------
def _supcon_loss_ref(features, intents=None, mask=None, *, temperature=0.07,
                     contrast_mode="all"):
    if features.ndim > 3:
        features = features.reshape(features.shape[0], features.shape[1], -1)
    x = features.astype(jnp.float32)
    norm = jnp.linalg.norm(x, axis=2, keepdims=True)
    x = x / jnp.maximum(norm, 1e-12)
    batch_size, n_views, _ = x.shape
    if intents is None and mask is None:
        base_mask = jnp.eye(batch_size, dtype=jnp.float32)
    elif intents is not None:
        intents = intents.reshape(-1, 1)
        base_mask = (intents == intents.T).astype(jnp.float32)
    else:
        base_mask = mask.astype(jnp.float32)
    contrast_count = n_views
    contrast_feature = jnp.transpose(x, (1, 0, 2)).reshape(n_views * batch_size, -1)
    if contrast_mode == "one":
        anchor_feature, anchor_count = x[:, 0], 1
    else:
        anchor_feature, anchor_count = contrast_feature, contrast_count
    logits = jnp.matmul(anchor_feature, contrast_feature.T,
                        precision=lax.Precision.HIGHEST) / temperature
    logits = logits - jnp.max(logits, axis=1, keepdims=True)
    m = jnp.tile(base_mask, (anchor_count, contrast_count))
    A, N = logits.shape
    logits_mask = 1.0 - (jnp.arange(A)[:, None] == jnp.arange(N)[None, :]).astype(
        jnp.float32)
    m = m * logits_mask
    exp_logits = jnp.exp(logits) * logits_mask
    log_prob = logits - jnp.log(jnp.sum(exp_logits, axis=1, keepdims=True))
    mean_log_prob_pos = jnp.sum(m * log_prob, axis=1) / jnp.sum(m, axis=1)
    return jnp.mean(-mean_log_prob_pos)


if __name__ == "__main__":
    key = jax.random.PRNGKey(0)
    k_feat, _ = jax.random.split(key)

    bsz, n_views, d = 8, 2, 32
    features = jax.random.normal(k_feat, (bsz, n_views, d), dtype=jnp.float32)
    intents = jnp.array([0, 1, 2, 0, 1, 3, 2, 0], dtype=jnp.int32)
    temperature = 0.07

    ref = jax.block_until_ready(
        _supcon_loss_ref(features, intents=intents, temperature=temperature,
                         contrast_mode="all"))

    # Exact f32 path, tight check.
    loss_f32 = jax.block_until_ready(
        supcon_loss(features, intents=intents, temperature=temperature,
                    contrast_mode="all", use_bf16=False))
    assert jnp.allclose(loss_f32, ref, rtol=1e-4, atol=1e-4), (loss_f32, ref)

    # Default bf16-MXU path (f32 accumulation), looser tolerance.
    loss_bf16 = jax.block_until_ready(
        supcon_loss(features, intents=intents, temperature=temperature,
                    contrast_mode="all"))
    assert jnp.allclose(loss_bf16, ref, rtol=5e-2, atol=5e-2), (loss_bf16, ref)

    # SimCLR (no labels) path.
    loss_simclr = jax.block_until_ready(
        supcon_loss(features, temperature=temperature, use_bf16=False))
    ref_simclr = _supcon_loss_ref(features, temperature=temperature)
    assert jnp.allclose(loss_simclr, ref_simclr, rtol=1e-4, atol=1e-4), (
        loss_simclr, ref_simclr)

    # contrast_mode='one' path.
    loss_one = jax.block_until_ready(
        supcon_loss(features, intents=intents, temperature=temperature,
                    contrast_mode="one", use_bf16=False))
    ref_one = _supcon_loss_ref(features, intents=intents, temperature=temperature,
                               contrast_mode="one")
    assert jnp.allclose(loss_one, ref_one, rtol=1e-4, atol=1e-4), (loss_one, ref_one)

    # Explicit-mask path (same mask as intents-equality, so same result as `ref`).
    explicit_mask = (intents[:, None] == intents[None, :]).astype(jnp.float32)
    loss_mask = jax.block_until_ready(
        supcon_loss(features, mask=explicit_mask, temperature=temperature,
                    use_bf16=False))
    assert jnp.allclose(loss_mask, ref, rtol=1e-4, atol=1e-4), (loss_mask, ref)

    print("KERNEL_OK")
</pallas_src>

<mosaic_0001>
module attributes {stable_mosaic.version = 11 : i64} {
  func.func @_supcon_labels_kernel(%arg0: i32, %arg1: memref<128x128xf32, #tpu.memory_space<vmem>>, %arg2: memref<128x1xi32, #tpu.memory_space<vmem>>, %arg3: memref<1x128xi32, #tpu.memory_space<vmem>>, %arg4: memref<1x8x128xf32, #tpu.memory_space<vmem>>) attributes {dimension_semantics = [#tpu.dimension_semantics<parallel>], iteration_bounds = array<i64: 1>, scalar_prefetch = 0 : i64, scratch_operands = 0 : i64, tpu.core_type = #tpu.core_type<tc>, window_params = [{pipeline_mode = #tpu.pipeline_mode<synchronous>, transform_indices = @transform_0, window_bounds = array<i64: 128, 128>}, {pipeline_mode = #tpu.pipeline_mode<synchronous>, transform_indices = @transform_1, window_bounds = array<i64: 128, 1>}, {pipeline_mode = #tpu.pipeline_mode<synchronous>, transform_indices = @transform_2, window_bounds = array<i64: 1, 128>}, {transform_indices = @transform_3, window_bounds = array<i64: 1, 8, 128>}]} {
    %c128_i32 = arith.constant 128 : i32
    %0 = arith.muli %arg0, %c128_i32 : i32
    %1 = tpu.assume_multiple %0, 128 : i32
    %c0 = arith.constant 0 : index
    %c0_0 = arith.constant 0 : index
    %2 = vector.load %arg1[%c0, %c0_0] : memref<128x128xf32, #tpu.memory_space<vmem>>, vector<128x128xf32>
    %3 = arith.index_cast %1 : i32 to index
    %c0_1 = arith.constant 0 : index
    %4 = vector.load %arg1[%3, %c0_1] : memref<128x128xf32, #tpu.memory_space<vmem>>, vector<128x128xf32>
    %cst = arith.constant dense<0.000000e+00> : vector<128x128xf32>
    %5 = tpu.matmul %4, %2, %cst {dimension_numbers = #tpu.dot_dimension_numbers<[1], [1], [0], [0], [0, 0, 1, 0], [], []>} : vector<128x128xf32>, vector<128x128xf32>, vector<128x128xf32> -> vector<128x128xf32>
    %6 = tpu.iota {dimensions = array<i32: 1>} : vector<128x128xi32>
    %7 = tpu.iota {dimensions = array<i32: 0>} : vector<128x128xi32>
    %8 = vector.broadcast %1 : i32 to vector<128x128xi32>
    %9 = arith.addi %8, %7 : vector<128x128xi32>
    %c16_i32 = arith.constant 16 : i32
    %10 = vector.broadcast %c16_i32 : i32 to vector<128x128xi32>
    %11 = arith.cmpi slt, %6, %10 : vector<128x128xi32>
    %12 = arith.cmpi ne, %6, %9 : vector<128x128xi32>
    %13 = arith.andi %11, %12 : vector<128x128xi1>
    %cst_2 = arith.constant -1.000000e+30 : f32
    %14 = vector.broadcast %cst_2 : f32 to vector<128x128xf32>
    %15 = arith.select %11, %5, %14 : vector<128x128xi1>, vector<128x128xf32>
    %cst_3 = arith.constant dense<0xFF800000> : vector<128xf32>
    %16 = vector.multi_reduction <maximumf>, %15, %cst_3 [1] : vector<128x128xf32> to vector<128xf32>
    %17 = vector.shape_cast %16 : vector<128xf32> to vector<128x1xf32>
    %18 = vector.broadcast %17 : vector<128x1xf32> to vector<128x128xf32>
    %19 = arith.subf %5, %18 : vector<128x128xf32>
    %20 = math.exp %19 : vector<128x128xf32>
    %cst_4 = arith.constant 0.000000e+00 : f32
    %21 = vector.broadcast %cst_4 : f32 to vector<128x128xf32>
    %22 = arith.select %13, %20, %21 : vector<128x128xi1>, vector<128x128xf32>
    %cst_5 = arith.constant dense<0.000000e+00> : vector<128xf32>
    %23 = vector.multi_reduction <add>, %22, %cst_5 [1] : vector<128x128xf32> to vector<128xf32>
    %24 = vector.shape_cast %23 : vector<128xf32> to vector<128x1xf32>
    %25 = math.log %24 : vector<128x1xf32>
    %26 = tpu.iota {dimensions = array<i32: 0>} : vector<128x1xi32>
    %27 = vector.broadcast %1 : i32 to vector<128x1xi32>
    %28 = arith.addi %27, %26 : vector<128x1xi32>
    %c16_i32_6 = arith.constant 16 : i32
    %29 = vector.broadcast %c16_i32_6 : i32 to vector<128x1xi32>
    %30 = arith.cmpi slt, %28, %29 : vector<128x1xi32>
    %31 = arith.index_cast %1 : i32 to index
    %c0_7 = arith.constant 0 : index
    %32 = vector.load %arg2[%31, %c0_7] : memref<128x1xi32, #tpu.memory_space<vmem>>, vector<128x1xi32>
    %c0_8 = arith.constant 0 : index
    %c0_9 = arith.constant 0 : index
    %33 = vector.load %arg3[%c0_8, %c0_9] : memref<1x128xi32, #tpu.memory_space<vmem>>, vector<1x128xi32>
    %34 = vector.broadcast %32 : vector<128x1xi32> to vector<128x128xi32>
    %35 = vector.broadcast %33 : vector<1x128xi32> to vector<128x128xi32>
    %36 = arith.cmpi eq, %34, %35 : vector<128x128xi32>
    %37 = arith.andi %36, %13 : vector<128x128xi1>
    %38 = arith.extui %37 : vector<128x128xi1> to vector<128x128xi32>
    %39 = arith.sitofp %38 : vector<128x128xi32> to vector<128x128xf32>
    %cst_10 = arith.constant dense<0.000000e+00> : vector<128xf32>
    %40 = vector.multi_reduction <add>, %39, %cst_10 [1] : vector<128x128xf32> to vector<128xf32>
    %41 = vector.shape_cast %40 : vector<128xf32> to vector<128x1xf32>
    %42 = arith.mulf %39, %19 : vector<128x128xf32>
    %cst_11 = arith.constant dense<0.000000e+00> : vector<128xf32>
    %43 = vector.multi_reduction <add>, %42, %cst_11 [1] : vector<128x128xf32> to vector<128xf32>
    %44 = vector.shape_cast %43 : vector<128xf32> to vector<128x1xf32>
    %45 = arith.mulf %25, %41 : vector<128x1xf32>
    %46 = arith.subf %44, %45 : vector<128x1xf32>
    %cst_12 = arith.constant 1.000000e+00 : f32
    %47 = vector.broadcast %cst_12 : f32 to vector<128x1xf32>
    %48 = arith.select %30, %41, %47 : vector<128x1xi1>, vector<128x1xf32>
    %49 = arith.divf %46, %48 : vector<128x1xf32>
    %cst_13 = arith.constant 0.000000e+00 : f32
    %50 = vector.broadcast %cst_13 : f32 to vector<128x1xf32>
    %51 = arith.select %30, %49, %50 : vector<128x1xi1>, vector<128x1xf32>
    %52 = vector.shape_cast %51 : vector<128x1xf32> to vector<1x128x1xf32>
    %cst_14 = arith.constant dense<0.000000e+00> : vector<1xf32>
    %53 = vector.multi_reduction <add>, %52, %cst_14 [1, 2] : vector<1x128x1xf32> to vector<1xf32>
    %54 = vector.shape_cast %53 : vector<1xf32> to vector<1x1x1xf32>
    %55 = vector.extract %54[0, 0, 0] : f32 from vector<1x1x1xf32>
    %56 = vector.broadcast %55 : f32 to vector<1x8x128xf32>
    %c0_15 = arith.constant 0 : index
    %c0_16 = arith.constant 0 : index
    %c0_17 = arith.constant 0 : index
    %57 = vector.load %arg4[%c0_15, %c0_16, %c0_17] : memref<1x8x128xf32, #tpu.memory_space<vmem>>, vector<1x8x128xf32>
    tpu.vector_store %arg4[%c0_15, %c0_16, %c0_17], %56 {strides = array<i32>} : memref<1x8x128xf32, #tpu.memory_space<vmem>>, vector<1x8x128xf32>,
    return
  }
  func.func @transform_0(%arg0: i32) -> (i32, i32) {
    %c0_i32 = arith.constant 0 : i32
    %c0_i32_0 = arith.constant 0 : i32
    %c0_i32_1 = arith.constant 0 : i32
    return %c0_i32, %c0_i32_0 : i32, i32
  }
  func.func @transform_1(%arg0: i32) -> (i32, i32) {
    %c0_i32 = arith.constant 0 : i32
    %c0_i32_0 = arith.constant 0 : i32
    %c0_i32_1 = arith.constant 0 : i32
    return %c0_i32, %c0_i32_0 : i32, i32
  }
  func.func @transform_2(%arg0: i32) -> (i32, i32) {
    %c0_i32 = arith.constant 0 : i32
    %c0_i32_0 = arith.constant 0 : i32
    %c0_i32_1 = arith.constant 0 : i32
    return %c0_i32, %c0_i32_0 : i32, i32
  }
  func.func @transform_3(%arg0: i32) -> (i32, i32, i32) {
    %c0_i32 = arith.constant 0 : i32
    %c0_i32_0 = arith.constant 0 : i32
    %c0_i32_1 = arith.constant 0 : i32
    return %arg0, %c0_i32, %c0_i32_0 : i32, i32, i32
  }
}

</mosaic_0001>

<llo_original>
// kernel: tpu_custom_call.1
$region0: #{tpu_custom_call.1}
  #allocation0 [shape = 'u32[]', space=smem, size = 0x4, offset = 0x4, fixed_abs, tag = 'smem constant byte address 0x4 - core index']
  #allocation1 [shape = 'u32[144,128]{1,0:T(1,128)}', space=vmem, size = 0x12000, scoped, tag = 'internal scratch']
  %s0 = inlined_call_operand.vmem [shape: f32[128,128], index: 0, kind: input, shape index: {}]
  %s1 = inlined_call_operand.vmem [shape: s32[128,1], index: 1, kind: input, shape index: {}]
  %s2 = inlined_call_operand.vmem [shape: s32[1,128], index: 2, kind: input, shape index: {}]
  %s3 = inlined_call_operand.hbm [shape: f32[1,8,128], index: 3, kind: output, shape index: {}]
  %s4 = sld [smem:[#allocation0]]
  $region22: #{tpu_custom_call.1} parent=0
    _
  %s6 = ssub.s32 1, %s4
  %s7 = scalar_select 0, %s6, %s4
  $region1: #{tpu_custom_call.1} parent=0
    #allocation2 [shape = 'u8[4096]{0}', space=vmem, size = 0x1000, scoped, tag = 'output window, operand 0, single buffered']
    #allocation3 [shape = 's32[1]{0}', space=sflag, size = 0x4, scoped, tag = 'scoped memory for tpu_custom_call.1']
    %8 = vsyncpa [#allocation3], 0
    // Predicated region
    $region2: #{tpu_custom_call.1} parent=1 // pred_check
      _
    $region3: #{tpu_custom_call.1} parent=1 // pred_check_branch
      %10 = sbr.rel (0) target = $region5
    $region4: #{tpu_custom_call.1} parent=1 // pred_region
      _
    $region5: #{tpu_custom_call.1} parent=1 // pred_fallthru
      _
    // Predicated region
    $region6: #{tpu_custom_call.1} parent=1 // pred_check
      _
    $region7: #{tpu_custom_call.1} parent=1 // pred_check_branch
      %12 = sbr.rel (0) target = $region9
    $region8: #{tpu_custom_call.1} parent=1 // pred_region
      _
    $region9: #{tpu_custom_call.1} parent=1 // pred_fallthru
      _
    // Predicated region
    $region10: #{tpu_custom_call.1} parent=1 // pred_check
      _
    $region11: #{tpu_custom_call.1} parent=1 // pred_check_branch
      %14 = sbr.rel (0) target = $region13
    $region12: #{tpu_custom_call.1} parent=1 // pred_region
      _
    $region13: #{tpu_custom_call.1} parent=1 // pred_fallthru
      _
    %s15 = smul.u32 0, 128
    %v16 = vld [vmem:[%s0] sm:$0xff]
    %v17 = vld [vmem:[%s0 + $0x8] sm:$0xff]
    %v18 = vld [vmem:[%s0 + $0x10] sm:$0xff]
    %v19 = vld [vmem:[%s0 + $0x18] sm:$0xff]
    %v20 = vld [vmem:[%s0 + $0x20] sm:$0xff]
    %v21 = vld [vmem:[%s0 + $0x28] sm:$0xff]
    %v22 = vld [vmem:[%s0 + $0x30] sm:$0xff]
    %v23 = vld [vmem:[%s0 + $0x38] sm:$0xff]
    %v24 = vld [vmem:[%s0 + $0x40] sm:$0xff]
    %v25 = vld [vmem:[%s0 + $0x48] sm:$0xff]
    %v26 = vld [vmem:[%s0 + $0x50] sm:$0xff]
    %v27 = vld [vmem:[%s0 + $0x58] sm:$0xff]
    %v28 = vld [vmem:[%s0 + $0x60] sm:$0xff]
    %v29 = vld [vmem:[%s0 + $0x68] sm:$0xff]
    %v30 = vld [vmem:[%s0 + $0x70] sm:$0xff]
    %v31 = vld [vmem:[%s0 + $0x78] sm:$0xff]
    %s32 = scalar_lea.vmem %s0, %s15
    %v33 = vld [vmem:[%s32] sm:$0xff]
    %v34 = vld [vmem:[%s32 + $0x8] sm:$0xff]
    %v35 = vld [vmem:[%s32 + $0x10] sm:$0xff]
    %v36 = vld [vmem:[%s32 + $0x18] sm:$0xff]
    %v37 = vld [vmem:[%s32 + $0x20] sm:$0xff]
    %v38 = vld [vmem:[%s32 + $0x28] sm:$0xff]
    %v39 = vld [vmem:[%s32 + $0x30] sm:$0xff]
    %v40 = vld [vmem:[%s32 + $0x38] sm:$0xff]
    %v41 = vld [vmem:[%s32 + $0x40] sm:$0xff]
    %v42 = vld [vmem:[%s32 + $0x48] sm:$0xff]
    %v43 = vld [vmem:[%s32 + $0x50] sm:$0xff]
    %v44 = vld [vmem:[%s32 + $0x58] sm:$0xff]
    %v45 = vld [vmem:[%s32 + $0x60] sm:$0xff]
    %v46 = vld [vmem:[%s32 + $0x68] sm:$0xff]
    %v47 = vld [vmem:[%s32 + $0x70] sm:$0xff]
    %v48 = vld [vmem:[%s32 + $0x78] sm:$0xff]
    %49 = vmatprep.subr.mxu0 0.0
    %50 = vmatpush1.xpose.msra.mxu0 %v16
    %51 = vmatprep.subr.mxu0 0.0
    %52 = vmatpush1.xpose.msra.mxu0 %v17
    %53 = vmatprep.subr.mxu0 0.0
    %54 = vmatpush1.xpose.msra.mxu0 %v18
    %55 = vmatprep.subr.mxu0 0.0
    %56 = vmatpush1.xpose.msra.mxu0 %v19
    %57 = vmatprep.subr.mxu0 0.0
    %58 = vmatpush1.xpose.msra.mxu0 %v20
    %59 = vmatprep.subr.mxu0 0.0
    %60 = vmatpush1.xpose.msra.mxu0 %v21
    %61 = vmatprep.subr.mxu0 0.0
    %62 = vmatpush1.xpose.msra.mxu0 %v22
    %63 = vmatprep.subr.mxu0 0.0
    %64 = vmatpush1.xpose.msra.mxu0 %v23
    %65 = vmatprep.subr.mxu0 0.0
    %66 = vmatpush1.xpose.msra.mxu0 %v24
    %67 = vmatprep.subr.mxu0 0.0
    %68 = vmatpush1.xpose.msra.mxu0 %v25
    %69 = vmatprep.subr.mxu0 0.0
    %70 = vmatpush1.xpose.msra.mxu0 %v26
    %71 = vmatprep.subr.mxu0 0.0
    %72 = vmatpush1.xpose.msra.mxu0 %v27
    %73 = vmatprep.subr.mxu0 0.0
    %74 = vmatpush1.xpose.msra.mxu0 %v28
    %75 = vmatprep.subr.mxu0 0.0
    %76 = vmatpush1.xpose.msra.mxu0 %v29
    %77 = vmatprep.subr.mxu0 0.0
    %78 = vmatpush1.xpose.msra.mxu0 %v30
    %79 = vmatprep.subr.mxu0 0.0
    %80 = vmatpush1.xpose.msra.mxu0 %v31
    %81 = vmatprep.subr.mxu0 0.0
    %82 = vmatpush1.xpose.msra.mxu0 0.0
    %83 = vmatprep.subr.mxu0 0.0
    %84 = vmatpush1.xpose.msra.mxu0 0.0
    %85 = vmatprep.subr.mxu0 0.0
    %86 = vmatpush1.xpose.msra.mxu0 0.0
    %87 = vmatprep.subr.mxu0 0.0
    %88 = vmatpush1.xpose.msra.mxu0 0.0
    %89 = vmatprep.subr.mxu0 0.0
    %90 = vmatpush1.xpose.msra.mxu0 0.0
    %91 = vmatprep.subr.mxu0 0.0
    %92 = vmatpush1.xpose.msra.mxu0 0.0
    %93 = vmatprep.subr.mxu0 0.0
    %94 = vmatpush1.xpose.msra.mxu0 0.0
    %95 = vmatprep.subr.mxu0 0.0
    %96 = vmatpush1.xpose.msra.mxu0 0.0
    %97 = vmatprep.subr.mxu0 0.0
    %98 = vmatpush1.xpose.msra.mxu0 0.0
    %99 = vmatprep.subr.mxu0 0.0
    %100 = vmatpush1.xpose.msra.mxu0 0.0
    %101 = vmatprep.subr.mxu0 0.0
    %102 = vmatpush1.xpose.msra.mxu0 0.0
    %103 = vmatprep.subr.mxu0 0.0
    %104 = vmatpush1.xpose.msra.mxu0 0.0
    %105 = vmatprep.subr.mxu0 0.0
    %106 = vmatpush1.xpose.msra.mxu0 0.0
    %107 = vmatprep.subr.mxu0 0.0
    %108 = vmatpush1.xpose.msra.mxu0 0.0
    %109 = vmatprep.subr.mxu0 0.0
    %110 = vmatpush1.xpose.msra.mxu0 0.0
    %111 = vmatprep.subr.mxu0 0.0
    %112 = vmatpush1.xpose.msra.mxu0 0.0
    %113 = vmatprep.mubr.f32.mxu0 0.0
    %114 = vmatmul.mubr.f32.gmra.mrb[0].mxu0 %v33
    %v115 = vpop.f32.mrb[0].mxu0
    %v116 = vadd.f32 0.0, %v115
    %v117 = vpop.f32.mrb[0].mxu0
    %118 = vmatprep.mubr.f32.mxu0 0.0
    %119 = vmatmul.mubr.f32.gmra.mrb[0].mxu0 %v34
    %v120 = vpop.f32.mrb[0].mxu0
    %v121 = vadd.f32 0.0, %v120
    %v122 = vpop.f32.mrb[0].mxu0
    %123 = vmatprep.mubr.f32.mxu0 0.0
    %124 = vmatmul.mubr.f32.gmra.mrb[0].mxu0 %v35
    %v125 = vpop.f32.mrb[0].mxu0
    %v126 = vadd.f32 0.0, %v125
    %v127 = vpop.f32.mrb[0].mxu0
    %128 = vmatprep.mubr.f32.mxu0 0.0
    %129 = vmatmul.mubr.f32.gmra.mrb[0].mxu0 %v36
    %v130 = vpop.f32.mrb[0].mxu0
    %v131 = vadd.f32 0.0, %v130
    %v132 = vpop.f32.mrb[0].mxu0
    %133 = vmatprep.mubr.f32.mxu0 0.0
    %134 = vmatmul.mubr.f32.gmra.mrb[0].mxu0 %v37
    %v135 = vpop.f32.mrb[0].mxu0
    %v136 = vadd.f32 0.0, %v135
    %v137 = vpop.f32.mrb[0].mxu0
    %138 = vmatprep.mubr.f32.mxu0 0.0
    %139 = vmatmul.mubr.f32.gmra.mrb[0].mxu0 %v38
    %v140 = vpop.f32.mrb[0].mxu0
    %v141 = vadd.f32 0.0, %v140
    %v142 = vpop.f32.mrb[0].mxu0
    %143 = vmatprep.mubr.f32.mxu0 0.0
    %144 = vmatmul.mubr.f32.gmra.mrb[0].mxu0 %v39
    %v145 = vpop.f32.mrb[0].mxu0
    %v146 = vadd.f32 0.0, %v145
    %v147 = vpop.f32.mrb[0].mxu0
    %148 = vmatprep.mubr.f32.mxu0 0.0
    %149 = vmatmul.mubr.f32.gmra.mrb[0].mxu0 %v40
    %v150 = vpop.f32.mrb[0].mxu0
    %v151 = vadd.f32 0.0, %v150
    %v152 = vpop.f32.mrb[0].mxu0
    %153 = vmatprep.mubr.f32.mxu0 0.0
    %154 = vmatmul.mubr.f32.gmra.mrb[0].mxu0 %v41
    %v155 = vpop.f32.mrb[0].mxu0
    %v156 = vadd.f32 0.0, %v155
    %v157 = vpop.f32.mrb[0].mxu0
    %158 = vmatprep.mubr.f32.mxu0 0.0
    %159 = vmatmul.mubr.f32.gmra.mrb[0].mxu0 %v42
    %v160 = vpop.f32.mrb[0].mxu0
    %v161 = vadd.f32 0.0, %v160
    %v162 = vpop.f32.mrb[0].mxu0
    %163 = vmatprep.mubr.f32.mxu0 0.0
    %164 = vmatmul.mubr.f32.gmra.mrb[0].mxu0 %v43
    %v165 = vpop.f32.mrb[0].mxu0
    %v166 = vadd.f32 0.0, %v165
    %v167 = vpop.f32.mrb[0].mxu0
    %168 = vmatprep.mubr.f32.mxu0 0.0
    %169 = vmatmul.mubr.f32.gmra.mrb[0].mxu0 %v44
    %v170 = vpop.f32.mrb[0].mxu0
    %v171 = vadd.f32 0.0, %v170
    %v172 = vpop.f32.mrb[0].mxu0
    %173 = vmatprep.mubr.f32.mxu0 0.0
    %174 = vmatmul.mubr.f32.gmra.mrb[0].mxu0 %v45
    %v175 = vpop.f32.mrb[0].mxu0
    %v176 = vadd.f32 0.0, %v175
    %v177 = vpop.f32.mrb[0].mxu0
    %178 = vmatprep.mubr.f32.mxu0 0.0
    %179 = vmatmul.mubr.f32.gmra.mrb[0].mxu0 %v46
    %v180 = vpop.f32.mrb[0].mxu0
    %v181 = vadd.f32 0.0, %v180
    %v182 = vpop.f32.mrb[0].mxu0
    %183 = vmatprep.mubr.f32.mxu0 0.0
    %184 = vmatmul.mubr.f32.gmra.mrb[0].mxu0 %v47
    %v185 = vpop.f32.mrb[0].mxu0
    %v186 = vadd.f32 0.0, %v185
    %v187 = vpop.f32.mrb[0].mxu0
    %188 = vmatprep.mubr.f32.mxu0 0.0
    %189 = vmatmul.mubr.f32.gmra.mrb[0].mxu0 %v48
    %v190 = vpop.f32.mrb[0].mxu0
    %v191 = vadd.f32 0.0, %v190
    %v192 = vpop.f32.mrb[0].mxu0
    %193 = vdwg.mxu0
    %v194 = vlaneseq
    %v195 = vand.u32 %v194, 127
    %v196 = vlaneseq
    %v197 = vshrl.u32 %v196, 7
    %v198 = vadd.s32 %v197, 8
    %v199 = vadd.s32 %v197, 16
    %v200 = vadd.s32 %v197, 24
    %v201 = vadd.s32 %v197, 32
    %v202 = vadd.s32 %v197, 40
    %v203 = vadd.s32 %v197, 48
    %v204 = vadd.s32 %v197, 56
    %v205 = vadd.s32 %v197, 64
    %v206 = vadd.s32 %v197, 72
    %v207 = vadd.s32 %v197, 80
    %v208 = vadd.s32 %v197, 88
    %v209 = vadd.s32 %v197, 96
    %v210 = vadd.s32 %v197, 104
    %v211 = vadd.s32 %v197, 112
    %v212 = vadd.s32 %v197, 120
    %v213 = vstv %s15
    %v214 = vadd.s32 %v213, %v197
    %v215 = vadd.s32 %v213, %v198
    %v216 = vadd.s32 %v213, %v199
    %v217 = vadd.s32 %v213, %v200
    %v218 = vadd.s32 %v213, %v201
    %v219 = vadd.s32 %v213, %v202
    %v220 = vadd.s32 %v213, %v203
    %v221 = vadd.s32 %v213, %v204
    %v222 = vadd.s32 %v213, %v205
    %v223 = vadd.s32 %v213, %v206
    %v224 = vadd.s32 %v213, %v207
    %v225 = vadd.s32 %v213, %v208
    %v226 = vadd.s32 %v213, %v209
    %v227 = vadd.s32 %v213, %v210
    %v228 = vadd.s32 %v213, %v211
    %v229 = vadd.s32 %v213, %v212
    %vm230 = vcmp.lt.s32.totalorder %v195, 16
    %vm231 = vcmp.ne.s32.totalorder %v195, %v214
    %vm232 = vcmp.ne.s32.totalorder %v195, %v215
    %vm233 = vcmp.ne.s32.totalorder %v195, %v216
    %vm234 = vcmp.ne.s32.totalorder %v195, %v217
    %vm235 = vcmp.ne.s32.totalorder %v195, %v218
    %vm236 = vcmp.ne.s32.totalorder %v195, %v219
    %vm237 = vcmp.ne.s32.totalorder %v195, %v220
    %vm238 = vcmp.ne.s32.totalorder %v195, %v221
    %vm239 = vcmp.ne.s32.totalorder %v195, %v222
    %vm240 = vcmp.ne.s32.totalorder %v195, %v223
    %vm241 = vcmp.ne.s32.totalorder %v195, %v224
    %vm242 = vcmp.ne.s32.totalorder %v195, %v225
    %vm243 = vcmp.ne.s32.totalorder %v195, %v226
    %vm244 = vcmp.ne.s32.totalorder %v195, %v227
    %vm245 = vcmp.ne.s32.totalorder %v195, %v228
    %vm246 = vcmp.ne.s32.totalorder %v195, %v229
    %vm247 = vmand %vm230, %vm231
    %vm248 = vmand %vm230, %vm232
    %vm249 = vmand %vm230, %vm233
    %vm250 = vmand %vm230, %vm234
    %vm251 = vmand %vm230, %vm235
    %vm252 = vmand %vm230, %vm236
    %vm253 = vmand %vm230, %vm237
    %vm254 = vmand %vm230, %vm238
    %vm255 = vmand %vm230, %vm239
    %vm256 = vmand %vm230, %vm240
    %vm257 = vmand %vm230, %vm241
    %vm258 = vmand %vm230, %vm242
    %vm259 = vmand %vm230, %vm243
    %vm260 = vmand %vm230, %vm244
    %vm261 = vmand %vm230, %vm245
    %vm262 = vmand %vm230, %vm246
    %v263 = vsel %vm230, %v116, -1e+30
    %v264 = vsel %vm230, %v121, -1e+30
    %v265 = vsel %vm230, %v126, -1e+30
    %v266 = vsel %vm230, %v131, -1e+30
    %v267 = vsel %vm230, %v136, -1e+30
    %v268 = vsel %vm230, %v141, -1e+30
    %v269 = vsel %vm230, %v146, -1e+30
    %v270 = vsel %vm230, %v151, -1e+30
    %v271 = vsel %vm230, %v156, -1e+30
    %v272 = vsel %vm230, %v161, -1e+30
    %v273 = vsel %vm230, %v166, -1e+30
    %v274 = vsel %vm230, %v171, -1e+30
    %v275 = vsel %vm230, %v176, -1e+30
    %v276 = vsel %vm230, %v181, -1e+30
    %v277 = vsel %vm230, %v186, -1e+30
    %v278 = vsel %vm230, %v191, -1e+30
    %279 = vmax.xlane.f32.xlu0 %v263
    %v280 = vpop.xlane.xlu0 %279
    %281 = vmax.xlane.f32.xlu0 %v264
    %v282 = vpop.xlane.xlu0 %281
    %283 = vmax.xlane.f32.xlu0 %v265
    %v284 = vpop.xlane.xlu0 %283
    %285 = vmax.xlane.f32.xlu0 %v266
    %v286 = vpop.xlane.xlu0 %285
    %287 = vmax.xlane.f32.xlu0 %v267
    %v288 = vpop.xlane.xlu0 %287
    %289 = vmax.xlane.f32.xlu0 %v268
    %v290 = vpop.xlane.xlu0 %289
    %291 = vmax.xlane.f32.xlu0 %v269
    %v292 = vpop.xlane.xlu0 %291
    %293 = vmax.xlane.f32.xlu0 %v270
    %v294 = vpop.xlane.xlu0 %293
    %295 = vmax.xlane.f32.xlu0 %v271
    %v296 = vpop.xlane.xlu0 %295
    %297 = vmax.xlane.f32.xlu0 %v272
    %v298 = vpop.xlane.xlu0 %297
    %299 = vmax.xlane.f32.xlu0 %v273
    %v300 = vpop.xlane.xlu0 %299
    %301 = vmax.xlane.f32.xlu0 %v274
    %v302 = vpop.xlane.xlu0 %301
    %303 = vmax.xlane.f32.xlu0 %v275
    %v304 = vpop.xlane.xlu0 %303
    %305 = vmax.xlane.f32.xlu0 %v276
    %v306 = vpop.xlane.xlu0 %305
    %307 = vmax.xlane.f32.xlu0 %v277
    %v308 = vpop.xlane.xlu0 %307
    %309 = vmax.xlane.f32.xlu0 %v278
    %v310 = vpop.xlane.xlu0 %309
    %v311 = vsub.f32 %v116, %v280
    %v312 = vsub.f32 %v121, %v282
    %v313 = vsub.f32 %v126, %v284
    %v314 = vsub.f32 %v131, %v286
    %v315 = vsub.f32 %v136, %v288
    %v316 = vsub.f32 %v141, %v290
    %v317 = vsub.f32 %v146, %v292
    %v318 = vsub.f32 %v151, %v294
    %v319 = vsub.f32 %v156, %v296
    %v320 = vsub.f32 %v161, %v298
    %v321 = vsub.f32 %v166, %v300
    %v322 = vsub.f32 %v171, %v302
    %v323 = vsub.f32 %v176, %v304
    %v324 = vsub.f32 %v181, %v306
    %v325 = vsub.f32 %v186, %v308
    %v326 = vsub.f32 %v191, %v310
    %v327 = vmul.f32 %v311, 1.442695
    %v328 = vpow.pop %v327
    %v329 = vmul.f32 %v312, 1.442695
    %v330 = vpow.pop %v329
    %v331 = vmul.f32 %v313, 1.442695
    %v332 = vpow.pop %v331
    %v333 = vmul.f32 %v314, 1.442695
    %v334 = vpow.pop %v333
    %v335 = vmul.f32 %v315, 1.442695
    %v336 = vpow.pop %v335
    %v337 = vmul.f32 %v316, 1.442695
    %v338 = vpow.pop %v337
    %v339 = vmul.f32 %v317, 1.442695
    %v340 = vpow.pop %v339
    %v341 = vmul.f32 %v318, 1.442695
    %v342 = vpow.pop %v341
    %v343 = vmul.f32 %v319, 1.442695
    %v344 = vpow.pop %v343
    %v345 = vmul.f32 %v320, 1.442695
    %v346 = vpow.pop %v345
    %v347 = vmul.f32 %v321, 1.442695
    %v348 = vpow.pop %v347
    %v349 = vmul.f32 %v322, 1.442695
    %v350 = vpow.pop %v349
    %v351 = vmul.f32 %v323, 1.442695
    %v352 = vpow.pop %v351
    %v353 = vmul.f32 %v324, 1.442695
    %v354 = vpow.pop %v353
    %v355 = vmul.f32 %v325, 1.442695
    %v356 = vpow.pop %v355
    %v357 = vmul.f32 %v326, 1.442695
    %v358 = vpow.pop %v357
    %v359 = vsel %vm247, %v328, 0.0
    %v360 = vsel %vm248, %v330, 0.0
    %v361 = vsel %vm249, %v332, 0.0
    %v362 = vsel %vm250, %v334, 0.0
    %v363 = vsel %vm251, %v336, 0.0
    %v364 = vsel %vm252, %v338, 0.0
    %v365 = vsel %vm253, %v340, 0.0
    %v366 = vsel %vm254, %v342, 0.0
    %v367 = vsel %vm255, %v344, 0.0
    %v368 = vsel %vm256, %v346, 0.0
    %v369 = vsel %vm257, %v348, 0.0
    %v370 = vsel %vm258, %v350, 0.0
    %v371 = vsel %vm259, %v352, 0.0
    %v372 = vsel %vm260, %v354, 0.0
    %v373 = vsel %vm261, %v356, 0.0
    %v374 = vsel %vm262, %v358, 0.0
    %375 = vadd.xlane.f32.xlu0 %v359
    %v376 = vpop.xlane.xlu0 %375
    %377 = vadd.xlane.f32.xlu0 %v360
    %v378 = vpop.xlane.xlu0 %377
    %379 = vadd.xlane.f32.xlu0 %v361
    %v380 = vpop.xlane.xlu0 %379
    %381 = vadd.xlane.f32.xlu0 %v362
    %v382 = vpop.xlane.xlu0 %381
    %383 = vadd.xlane.f32.xlu0 %v363
    %v384 = vpop.xlane.xlu0 %383
    %385 = vadd.xlane.f32.xlu0 %v364
    %v386 = vpop.xlane.xlu0 %385
    %387 = vadd.xlane.f32.xlu0 %v365
    %v388 = vpop.xlane.xlu0 %387
    %389 = vadd.xlane.f32.xlu0 %v366
    %v390 = vpop.xlane.xlu0 %389
    %391 = vadd.xlane.f32.xlu0 %v367
    %v392 = vpop.xlane.xlu0 %391
    %393 = vadd.xlane.f32.xlu0 %v368
    %v394 = vpop.xlane.xlu0 %393
    %395 = vadd.xlane.f32.xlu0 %v369
    %v396 = vpop.xlane.xlu0 %395
    %397 = vadd.xlane.f32.xlu0 %v370
    %v398 = vpop.xlane.xlu0 %397
    %399 = vadd.xlane.f32.xlu0 %v371
    %v400 = vpop.xlane.xlu0 %399
    %401 = vadd.xlane.f32.xlu0 %v372
    %v402 = vpop.xlane.xlu0 %401
    %403 = vadd.xlane.f32.xlu0 %v373
    %v404 = vpop.xlane.xlu0 %403
    %405 = vadd.xlane.f32.xlu0 %v374
    %v406 = vpop.xlane.xlu0 %405
    %v407 = vlog2.pop %v376
    %v408 = vmul.f32 %v407, 0.6931472
    %v409 = vlog2.pop %v378
    %v410 = vmul.f32 %v409, 0.6931472
    %v411 = vlog2.pop %v380
    %v412 = vmul.f32 %v411, 0.6931472
    %v413 = vlog2.pop %v382
    %v414 = vmul.f32 %v413, 0.6931472
    %v415 = vlog2.pop %v384
    %v416 = vmul.f32 %v415, 0.6931472
    %v417 = vlog2.pop %v386
    %v418 = vmul.f32 %v417, 0.6931472
    %v419 = vlog2.pop %v388
    %v420 = vmul.f32 %v419, 0.6931472
    %v421 = vlog2.pop %v390
    %v422 = vmul.f32 %v421, 0.6931472
    %v423 = vlog2.pop %v392
    %v424 = vmul.f32 %v423, 0.6931472
    %v425 = vlog2.pop %v394
    %v426 = vmul.f32 %v425, 0.6931472
    %v427 = vlog2.pop %v396
    %v428 = vmul.f32 %v427, 0.6931472
    %v429 = vlog2.pop %v398
    %v430 = vmul.f32 %v429, 0.6931472
    %v431 = vlog2.pop %v400
    %v432 = vmul.f32 %v431, 0.6931472
    %v433 = vlog2.pop %v402
    %v434 = vmul.f32 %v433, 0.6931472
    %v435 = vlog2.pop %v404
    %v436 = vmul.f32 %v435, 0.6931472
    %v437 = vlog2.pop %v406
    %v438 = vmul.f32 %v437, 0.6931472
    %vm439 = vcmp.lt.s32.totalorder %v214, 16
    %vm440 = vcmp.lt.s32.totalorder %v215, 16
    %vm441 = vcmp.lt.s32.totalorder %v216, 16
    %vm442 = vcmp.lt.s32.totalorder %v217, 16
    %vm443 = vcmp.lt.s32.totalorder %v218, 16
    %vm444 = vcmp.lt.s32.totalorder %v219, 16
    %vm445 = vcmp.lt.s32.totalorder %v220, 16
    %vm446 = vcmp.lt.s32.totalorder %v221, 16
    %vm447 = vcmp.lt.s32.totalorder %v222, 16
    %vm448 = vcmp.lt.s32.totalorder %v223, 16
    %vm449 = vcmp.lt.s32.totalorder %v224, 16
    %vm450 = vcmp.lt.s32.totalorder %v225, 16
    %vm451 = vcmp.lt.s32.totalorder %v226, 16
    %vm452 = vcmp.lt.s32.totalorder %v227, 16
    %vm453 = vcmp.lt.s32.totalorder %v228, 16
    %vm454 = vcmp.lt.s32.totalorder %v229, 16
    %s455 = scalar_lea.vmem %s1, %s15
    %v456 = vld [vmem:[%s455] sm:$0xff]
    %v457 = vld [vmem:[%s455 + $0x8] sm:$0xff]
    %v458 = vld [vmem:[%s455 + $0x10] sm:$0xff]
    %v459 = vld [vmem:[%s455 + $0x18] sm:$0xff]
    %v460 = vld [vmem:[%s455 + $0x20] sm:$0xff]
    %v461 = vld [vmem:[%s455 + $0x28] sm:$0xff]
    %v462 = vld [vmem:[%s455 + $0x30] sm:$0xff]
    %v463 = vld [vmem:[%s455 + $0x38] sm:$0xff]
    %v464 = vld [vmem:[%s455 + $0x40] sm:$0xff]
    %v465 = vld [vmem:[%s455 + $0x48] sm:$0xff]
    %v466 = vld [vmem:[%s455 + $0x50] sm:$0xff]
    %v467 = vld [vmem:[%s455 + $0x58] sm:$0xff]
    %v468 = vld [vmem:[%s455 + $0x60] sm:$0xff]
    %v469 = vld [vmem:[%s455 + $0x68] sm:$0xff]
    %v470 = vld [vmem:[%s455 + $0x70] sm:$0xff]
    %v471 = vld [vmem:[%s455 + $0x78] sm:$0xff]
    %v472 = vld [vmem:[%s2] sm:$0x1]
    %473 = vset.pattern.permute.xlu0 0
    %474 = vperm.xlu0 %473, %v456
    %v475 = vpop.permute.xlu0 %474
    %476 = vset.pattern.permute.xlu0 0
    %477 = vperm.xlu0 %476, %v457
    %v478 = vpop.permute.xlu0 %477
    %479 = vset.pattern.permute.xlu0 0
    %480 = vperm.xlu0 %479, %v458
    %v481 = vpop.permute.xlu0 %480
    %482 = vset.pattern.permute.xlu0 0
    %483 = vperm.xlu0 %482, %v459
    %v484 = vpop.permute.xlu0 %483
    %485 = vset.pattern.permute.xlu0 0
    %486 = vperm.xlu0 %485, %v460
    %v487 = vpop.permute.xlu0 %486
    %488 = vset.pattern.permute.xlu0 0
    %489 = vperm.xlu0 %488, %v461
    %v490 = vpop.permute.xlu0 %489
    %491 = vset.pattern.permute.xlu0 0
    %492 = vperm.xlu0 %491, %v462
    %v493 = vpop.permute.xlu0 %492
    %494 = vset.pattern.permute.xlu0 0
    %495 = vperm.xlu0 %494, %v463
    %v496 = vpop.permute.xlu0 %495
    %497 = vset.pattern.permute.xlu0 0
    %498 = vperm.xlu0 %497, %v464
    %v499 = vpop.permute.xlu0 %498
    %500 = vset.pattern.permute.xlu0 0
    %501 = vperm.xlu0 %500, %v465
    %v502 = vpop.permute.xlu0 %501
    %503 = vset.pattern.permute.xlu0 0
    %504 = vperm.xlu0 %503, %v466
    %v505 = vpop.permute.xlu0 %504
    %506 = vset.pattern.permute.xlu0 0
    %507 = vperm.xlu0 %506, %v467
    %v508 = vpop.permute.xlu0 %507
    %509 = vset.pattern.permute.xlu0 0
    %510 = vperm.xlu0 %509, %v468
    %v511 = vpop.permute.xlu0 %510
    %512 = vset.pattern.permute.xlu0 0
    %513 = vperm.xlu0 %512, %v469
    %v514 = vpop.permute.xlu0 %513
    %515 = vset.pattern.permute.xlu0 0
    %516 = vperm.xlu0 %515, %v470
    %v517 = vpop.permute.xlu0 %516
    %518 = vset.pattern.permute.xlu0 0
    %519 = vperm.xlu0 %518, %v471
    %v520 = vpop.permute.xlu0 %519
    %v521 = vlaneseq
    %v522 = vshrl.u32 %v521, 7
    %v523 = vsub.s32 0, %v522
    %v524 = vrot.slane %v472, %v523
    %vm525 = vcmp.eq.s32.totalorder %v475, %v524
    %vm526 = vcmp.eq.s32.totalorder %v478, %v524
    %vm527 = vcmp.eq.s32.totalorder %v481, %v524
    %vm528 = vcmp.eq.s32.totalorder %v484, %v524
    %vm529 = vcmp.eq.s32.totalorder %v487, %v524
    %vm530 = vcmp.eq.s32.totalorder %v490, %v524
    %vm531 = vcmp.eq.s32.totalorder %v493, %v524
    %vm532 = vcmp.eq.s32.totalorder %v496, %v524
    %vm533 = vcmp.eq.s32.totalorder %v499, %v524
    %vm534 = vcmp.eq.s32.totalorder %v502, %v524
    %vm535 = vcmp.eq.s32.totalorder %v505, %v524
    %vm536 = vcmp.eq.s32.totalorder %v508, %v524
    %vm537 = vcmp.eq.s32.totalorder %v511, %v524
    %vm538 = vcmp.eq.s32.totalorder %v514, %v524
    %vm539 = vcmp.eq.s32.totalorder %v517, %v524
    %vm540 = vcmp.eq.s32.totalorder %v520, %v524
    %vm541 = vmand %vm525, %vm247
    %vm542 = vmand %vm526, %vm248
    %vm543 = vmand %vm527, %vm249
    %vm544 = vmand %vm528, %vm250
    %vm545 = vmand %vm529, %vm251
    %vm546 = vmand %vm530, %vm252
    %vm547 = vmand %vm531, %vm253
    %vm548 = vmand %vm532, %vm254
    %vm549 = vmand %vm533, %vm255
    %vm550 = vmand %vm534, %vm256
    %vm551 = vmand %vm535, %vm257
    %vm552 = vmand %vm536, %vm258
    %vm553 = vmand %vm537, %vm259
    %vm554 = vmand %vm538, %vm260
    %vm555 = vmand %vm539, %vm261
    %vm556 = vmand %vm540, %vm262
    %v557 = vsel %vm541, 1, 0
    %v558 = vsel %vm542, 1, 0
    %v559 = vsel %vm543, 1, 0
    %v560 = vsel %vm544, 1, 0
    %v561 = vsel %vm545, 1, 0
    %v562 = vsel %vm546, 1, 0
    %v563 = vsel %vm547, 1, 0
    %v564 = vsel %vm548, 1, 0
    %v565 = vsel %vm549, 1, 0
    %v566 = vsel %vm550, 1, 0
    %v567 = vsel %vm551, 1, 0
    %v568 = vsel %vm552, 1, 0
    %v569 = vsel %vm553, 1, 0
    %v570 = vsel %vm554, 1, 0
    %v571 = vsel %vm555, 1, 0
    %v572 = vsel %vm556, 1, 0
    %v573 = vcvt.s32.f32 %v557
    %v574 = vcvt.s32.f32 %v558
    %v575 = vcvt.s32.f32 %v559
    %v576 = vcvt.s32.f32 %v560
    %v577 = vcvt.s32.f32 %v561
    %v578 = vcvt.s32.f32 %v562
    %v579 = vcvt.s32.f32 %v563
    %v580 = vcvt.s32.f32 %v564
    %v581 = vcvt.s32.f32 %v565
    %v582 = vcvt.s32.f32 %v566
    %v583 = vcvt.s32.f32 %v567
    %v584 = vcvt.s32.f32 %v568
    %v585 = vcvt.s32.f32 %v569
    %v586 = vcvt.s32.f32 %v570
    %v587 = vcvt.s32.f32 %v571
    %v588 = vcvt.s32.f32 %v572
    %589 = vadd.xlane.f32.xlu0 %v573
    %v590 = vpop.xlane.xlu0 %589
    %591 = vadd.xlane.f32.xlu0 %v574
    %v592 = vpop.xlane.xlu0 %591
    %593 = vadd.xlane.f32.xlu0 %v575
    %v594 = vpop.xlane.xlu0 %593
    %595 = vadd.xlane.f32.xlu0 %v576
    %v596 = vpop.xlane.xlu0 %595
    %597 = vadd.xlane.f32.xlu0 %v577
    %v598 = vpop.xlane.xlu0 %597
    %599 = vadd.xlane.f32.xlu0 %v578
    %v600 = vpop.xlane.xlu0 %599
    %601 = vadd.xlane.f32.xlu0 %v579
    %v602 = vpop.xlane.xlu0 %601
    %603 = vadd.xlane.f32.xlu0 %v580
    %v604 = vpop.xlane.xlu0 %603
    %605 = vadd.xlane.f32.xlu0 %v581
    %v606 = vpop.xlane.xlu0 %605
    %607 = vadd.xlane.f32.xlu0 %v582
    %v608 = vpop.xlane.xlu0 %607
    %609 = vadd.xlane.f32.xlu0 %v583
    %v610 = vpop.xlane.xlu0 %609
    %611 = vadd.xlane.f32.xlu0 %v584
    %v612 = vpop.xlane.xlu0 %611
    %613 = vadd.xlane.f32.xlu0 %v585
    %v614 = vpop.xlane.xlu0 %613
    %615 = vadd.xlane.f32.xlu0 %v586
    %v616 = vpop.xlane.xlu0 %615
    %617 = vadd.xlane.f32.xlu0 %v587
    %v618 = vpop.xlane.xlu0 %617
    %619 = vadd.xlane.f32.xlu0 %v588
    %v620 = vpop.xlane.xlu0 %619
    %v621 = vmul.f32 %v573, %v311
    %v622 = vmul.f32 %v574, %v312
    %v623 = vmul.f32 %v575, %v313
    %v624 = vmul.f32 %v576, %v314
    %v625 = vmul.f32 %v577, %v315
    %v626 = vmul.f32 %v578, %v316
    %v627 = vmul.f32 %v579, %v317
    %v628 = vmul.f32 %v580, %v318
    %v629 = vmul.f32 %v581, %v319
    %v630 = vmul.f32 %v582, %v320
    %v631 = vmul.f32 %v583, %v321
    %v632 = vmul.f32 %v584, %v322
    %v633 = vmul.f32 %v585, %v323
    %v634 = vmul.f32 %v586, %v324
    %v635 = vmul.f32 %v587, %v325
    %v636 = vmul.f32 %v588, %v326
    %637 = vadd.xlane.f32.xlu0 %v621
    %v638 = vpop.xlane.xlu0 %637
    %639 = vadd.xlane.f32.xlu0 %v622
    %v640 = vpop.xlane.xlu0 %639
    %641 = vadd.xlane.f32.xlu0 %v623
    %v642 = vpop.xlane.xlu0 %641
    %643 = vadd.xlane.f32.xlu0 %v624
    %v644 = vpop.xlane.xlu0 %643
    %645 = vadd.xlane.f32.xlu0 %v625
    %v646 = vpop.xlane.xlu0 %645
    %647 = vadd.xlane.f32.xlu0 %v626
    %v648 = vpop.xlane.xlu0 %647
    %649 = vadd.xlane.f32.xlu0 %v627
    %v650 = vpop.xlane.xlu0 %649
    %651 = vadd.xlane.f32.xlu0 %v628
    %v652 = vpop.xlane.xlu0 %651
    %653 = vadd.xlane.f32.xlu0 %v629
    %v654 = vpop.xlane.xlu0 %653
    %655 = vadd.xlane.f32.xlu0 %v630
    %v656 = vpop.xlane.xlu0 %655
    %657 = vadd.xlane.f32.xlu0 %v631
    %v658 = vpop.xlane.xlu0 %657
    %659 = vadd.xlane.f32.xlu0 %v632
    %v660 = vpop.xlane.xlu0 %659
    %661 = vadd.xlane.f32.xlu0 %v633
    %v662 = vpop.xlane.xlu0 %661
    %663 = vadd.xlane.f32.xlu0 %v634
    %v664 = vpop.xlane.xlu0 %663
    %665 = vadd.xlane.f32.xlu0 %v635
    %v666 = vpop.xlane.xlu0 %665
    %667 = vadd.xlane.f32.xlu0 %v636
    %v668 = vpop.xlane.xlu0 %667
    %v669 = vmul.f32 %v408, %v590
    %v670 = vmul.f32 %v410, %v592
    %v671 = vmul.f32 %v412, %v594
    %v672 = vmul.f32 %v414, %v596
    %v673 = vmul.f32 %v416, %v598
    %v674 = vmul.f32 %v418, %v600
    %v675 = vmul.f32 %v420, %v602
    %v676 = vmul.f32 %v422, %v604
    %v677 = vmul.f32 %v424, %v606
    %v678 = vmul.f32 %v426, %v608
    %v679 = vmul.f32 %v428, %v610
    %v680 = vmul.f32 %v430, %v612
    %v681 = vmul.f32 %v432, %v614
    %v682 = vmul.f32 %v434, %v616
    %v683 = vmul.f32 %v436, %v618
    %v684 = vmul.f32 %v438, %v620
    %v685 = vsub.f32 %v638, %v669
    %v686 = vsub.f32 %v640, %v670
    %v687 = vsub.f32 %v642, %v671
    %v688 = vsub.f32 %v644, %v672
    %v689 = vsub.f32 %v646, %v673
    %v690 = vsub.f32 %v648, %v674
    %v691 = vsub.f32 %v650, %v675
    %v692 = vsub.f32 %v652, %v676
    %v693 = vsub.f32 %v654, %v677
    %v694 = vsub.f32 %v656, %v678
    %v695 = vsub.f32 %v658, %v679
    %v696 = vsub.f32 %v660, %v680
    %v697 = vsub.f32 %v662, %v681
    %v698 = vsub.f32 %v664, %v682
    %v699 = vsub.f32 %v666, %v683
    %v700 = vsub.f32 %v668, %v684
    %v701 = vsel %vm439, %v590, 1.0
    %v702 = vsel %vm440, %v592, 1.0
    %v703 = vsel %vm441, %v594, 1.0
    %v704 = vsel %vm442, %v596, 1.0
    %v705 = vsel %vm443, %v598, 1.0
    %v706 = vsel %vm444, %v600, 1.0
    %v707 = vsel %vm445, %v602, 1.0
    %v708 = vsel %vm446, %v604, 1.0
    %v709 = vsel %vm447, %v606, 1.0
    %v710 = vsel %vm448, %v608, 1.0
    %v711 = vsel %vm449, %v610, 1.0
    %v712 = vsel %vm450, %v612, 1.0
    %v713 = vsel %vm451, %v614, 1.0
    %v714 = vsel %vm452, %v616, 1.0
    %v715 = vsel %vm453, %v618, 1.0
    %v716 = vsel %vm454, %v620, 1.0
    %v717 = vrcp.pop %v701
    %v718 = vmul.f32 %v685, %v717
    %v719 = vrcp.pop %v702
    %v720 = vmul.f32 %v686, %v719
    %v721 = vrcp.pop %v703
    %v722 = vmul.f32 %v687, %v721
    %v723 = vrcp.pop %v704
    %v724 = vmul.f32 %v688, %v723
    %v725 = vrcp.pop %v705
    %v726 = vmul.f32 %v689, %v725
    %v727 = vrcp.pop %v706
    %v728 = vmul.f32 %v690, %v727
    %v729 = vrcp.pop %v707
    %v730 = vmul.f32 %v691, %v729
    %v731 = vrcp.pop %v708
    %v732 = vmul.f32 %v692, %v731
    %v733 = vrcp.pop %v709
    %v734 = vmul.f32 %v693, %v733
    %v735 = vrcp.pop %v710
    %v736 = vmul.f32 %v694, %v735
    %v737 = vrcp.pop %v711
    %v738 = vmul.f32 %v695, %v737
    %v739 = vrcp.pop %v712
    %v740 = vmul.f32 %v696, %v739
    %v741 = vrcp.pop %v713
    %v742 = vmul.f32 %v697, %v741
    %v743 = vrcp.pop %v714
    %v744 = vmul.f32 %v698, %v743
    %v745 = vrcp.pop %v715
    %v746 = vmul.f32 %v699, %v745
    %v747 = vrcp.pop %v716
    %v748 = vmul.f32 %v700, %v747
    %v749 = vsel %vm439, %v718, 0.0
    %v750 = vsel %vm440, %v720, 0.0
    %v751 = vsel %vm441, %v722, 0.0
    %v752 = vsel %vm442, %v724, 0.0
    %v753 = vsel %vm443, %v726, 0.0
    %v754 = vsel %vm444, %v728, 0.0
    %v755 = vsel %vm445, %v730, 0.0
    %v756 = vsel %vm446, %v732, 0.0
    %v757 = vsel %vm447, %v734, 0.0
    %v758 = vsel %vm448, %v736, 0.0
    %v759 = vsel %vm449, %v738, 0.0
    %v760 = vsel %vm450, %v740, 0.0
    %v761 = vsel %vm451, %v742, 0.0
    %v762 = vsel %vm452, %v744, 0.0
    %v763 = vsel %vm453, %v746, 0.0
    %v764 = vsel %vm454, %v748, 0.0
    %vm765 = vcmask 7168
    %v766 = vsel %vm765, %v749, 0.0
    %v767 = vsel %vm765, %v750, 0.0
    %v768 = vadd.f32 %v766, %v767
    %v769 = vsel %vm765, %v751, 0.0
    %v770 = vadd.f32 %v768, %v769
    %v771 = vsel %vm765, %v752, 0.0
    %v772 = vadd.f32 %v770, %v771
    %v773 = vsel %vm765, %v753, 0.0
    %v774 = vadd.f32 %v772, %v773
    %v775 = vsel %vm765, %v754, 0.0
    %v776 = vadd.f32 %v774, %v775
    %v777 = vsel %vm765, %v755, 0.0
    %v778 = vadd.f32 %v776, %v777
    %v779 = vsel %vm765, %v756, 0.0
    %v780 = vadd.f32 %v778, %v779
    %v781 = vsel %vm765, %v757, 0.0
    %v782 = vadd.f32 %v780, %v781
    %v783 = vsel %vm765, %v758, 0.0
    %v784 = vadd.f32 %v782, %v783
    %v785 = vsel %vm765, %v759, 0.0
    %v786 = vadd.f32 %v784, %v785
    %v787 = vsel %vm765, %v760, 0.0
    %v788 = vadd.f32 %v786, %v787
    %v789 = vsel %vm765, %v761, 0.0
    %v790 = vadd.f32 %v788, %v789
    %v791 = vsel %vm765, %v762, 0.0
    %v792 = vadd.f32 %v790, %v791
    %v793 = vsel %vm765, %v763, 0.0
    %v794 = vadd.f32 %v792, %v793
    %v795 = vsel %vm765, %v764, 0.0
    %v796 = vadd.f32 %v794, %v795
    %797 = vadd.xlane.f32.xlu0 %v796
    %v798 = vpop.xlane.xlu0 %797
    %v799 = vrot.slane %v798, 4
    %v800 = vadd.f32 %v798, %v799
    %v801 = vrot.slane %v800, 2
    %v802 = vadd.f32 %v800, %v801
    %v803 = vrot.slane %v802, 1
    %v804 = vadd.f32 %v802, %v803
    %s805 = vtos %v804
    %v806 = vstv %s805
    %807 = vst [vmem:[#allocation2] sm:$0xff] %v806
    // Predicated region
    $region14: #{tpu_custom_call.1} parent=1 // pred_check
      _
    $region15: #{tpu_custom_call.1} parent=1 // pred_check_branch
      %809 = sbr.rel (0) target = $region17
    $region16: #{tpu_custom_call.1} parent=1 // pred_region
      %s811 = ssub.s32 128, 128
      %812 = vsyncadd [#allocation3], %s811
      %s814 = sshll.u32 [#allocation2], 4
      %s815 = int_to_ptr.vmem [resolvable:$true] %s814
      %817 = dma.vmem_to_hbm [thread:$0]  %s815, 128, %s3, [#allocation3]
    $region17: #{tpu_custom_call.1} parent=1 // pred_fallthru
      _
    // Predicated region
    $region18: #{tpu_custom_call.1} parent=1 // pred_check
      _
    $region19: #{tpu_custom_call.1} parent=1 // pred_check_branch
      %819 = sbr.rel (0) target = $region21
    $region20: #{tpu_custom_call.1} parent=1 // pred_region
      %820 = dma.done [#allocation3], 128
    $region21: #{tpu_custom_call.1} parent=1 // pred_fallthru
      _
    %821 = vsyncpa [#allocation3], 1

</llo_original>
